<compile_context>
chip_gen: v7x
topology: tpu7x:2x2x1
jax: 0.10.0
libtpu: 0.0.40
codegen_flags: <defaults>
</compile_context>

<pallas_src>
import functools

import jax
import jax.numpy as jnp
from jax import lax
from jax.experimental import pallas as pl
from jax.experimental.pallas import tpu as pltpu


def _round_up(x, m):
    return ((x + m - 1) // m) * m


def _gelu_exact(x):
    # PyTorch F.gelu default is the exact (erf) formulation.
    return 0.5 * x * (1.0 + lax.erf(x * (1.0 / jnp.sqrt(2.0))))


def _mlp_kernel(*refs, use_geglu, eps):
    if use_geglu:
        (x_ref, rmsw_ref, wup_ref, bup_ref, wg_ref, bg_ref,
         wdown_ref, bdown_ref, o_ref, xn_ref) = refs
    else:
        (x_ref, rmsw_ref, wup_ref, bup_ref,
         wdown_ref, bdown_ref, o_ref, xn_ref) = refs
        wg_ref = bg_ref = None

    k = pl.program_id(1)

    # --- once per row tile (k == 0): RMSNorm in f32, cache bf16 x_norm, and
    # seed the k-resident output block with residual + down-proj bias so it
    # doubles as the f32 accumulator for the d_ff reduction (no acc scratch).
    @pl.when(k == 0)
    def _():
        xf = x_ref[...].astype(jnp.float32)                    # (TM, D)
        ms = jnp.mean(xf * xf, axis=-1, keepdims=True)         # (TM, 1)
        xn = xf * lax.rsqrt(ms + eps)
        xn = xn * rmsw_ref[...].astype(jnp.float32)            # (1, D) bcast
        xn_ref[...] = xn.astype(xn_ref.dtype)
        o_ref[...] = (xf + bdown_ref[...]).astype(o_ref.dtype)

    xn = xn_ref[...]                                           # (TM, D) bf16

    # --- up projection (+ optional gate), bf16 MXU operands, f32 accumulate ---
    h = jnp.dot(xn, wup_ref[...],
                preferred_element_type=jnp.float32) + bup_ref[...]
    if use_geglu:
        g = jnp.dot(xn, wg_ref[...],
                    preferred_element_type=jnp.float32) + bg_ref[...]
        h = h * g

    # --- exact GELU after gating (matches the PyTorch module's ordering) ---
    h = _gelu_exact(h)

    # --- partial down projection; accumulate into the resident output block ---
    o_ref[...] += jnp.dot(h.astype(wdown_ref.dtype), wdown_ref[...],
                          preferred_element_type=jnp.float32).astype(o_ref.dtype)


def _vmem_limit_bytes():
    try:
        cap = pltpu.get_tpu_info().vmem_capacity_bytes
        return int(cap * 3 // 4)          # ~96 MiB v5e/v6e, ~48 MiB v7x
    except Exception:
        return 48 * 1024 * 1024           # conservative fallback, safe on v7x


def _default_tiles(use_geglu):
    """Per-generation (tm, tf).  tm is the weight-reuse / intensity lever; tf
    bounds the resident weight set (matters on v7x's 64 MiB VMEM per TC)."""
    kind = ""
    try:
        kind = jax.devices()[0].device_kind.lower()
    except Exception:
        pass
    small_vmem = False
    try:
        small_vmem = pltpu.get_tpu_info().vmem_capacity_bytes <= 64 * 1024 * 1024
    except Exception:
        pass
    if small_vmem or "7" in kind:
        # v7x: keep tm=256 (intensity), shrink tf under GEGLU to fit ~48 MiB.
        return 256, (256 if use_geglu else 512)
    if "v5" in kind:
        # v5e roofline crossover ~240 flops/byte: tm=256 is already compute-bound.
        return 256, 512
    # v6e (default): ~680 flops/byte needed -> bigger row tile for weight reuse.
    return 512, (512 if use_geglu else 1024)


def transformer_mlp(x, params, *, use_geglu, tm=None, tf=None):
    """x: [batch, seq, d_model] float32. Weights bf16, biases / rms weight f32."""
    b, s, d_model = x.shape
    d_ff = params["w_up"].shape[1]
    n = b * s
    x2 = x.reshape(n, d_model)

    dtm, dtf = _default_tiles(use_geglu)
    tm = tm or dtm
    tf = tf or dtf

    # Clamp tiles for small shapes.
    tm = min(tm, _round_up(n, 8))
    # Megacore: ensure >= 2 row tiles so the "parallel" axis feeds both v7x TCs.
    if n > 8 and _round_up(n, tm) // tm < 2:
        tm = _round_up((n + 1) // 2, 8)
    tf = min(tf, d_ff)
    while d_ff % tf:          # keep tf a divisor of d_ff (x128 at real sizes)
        tf //= 2
    n_k = d_ff // tf

    n_pad = _round_up(n, tm)
    if n_pad != n:
        x2 = jnp.pad(x2, ((0, n_pad - n), (0, 0)))  # zero rows are harmless

    # Contiguous per-tile weight layout [n_k, d_model, tf]: each (d_model, tf)
    # weight-tile DMA becomes a single contiguous block.  (In a real model,
    # hoist this re-layout to weight-loading time; w_down tiles are already
    # contiguous so it stays [d_ff, d_model].)
    wu = jnp.transpose(params["w_up"].reshape(d_model, n_k, tf), (1, 0, 2))
    if use_geglu:
        wg = jnp.transpose(params["w_g"].reshape(d_model, n_k, tf), (1, 0, 2))

    eps = float(jnp.finfo(jnp.float32).eps)  # nn.RMSNorm(eps=None) -> finfo eps
    kernel = functools.partial(_mlp_kernel, use_geglu=use_geglu, eps=eps)

    # rms_w / b_down have constant block indices; single-buffering them would
    # only reclaim ~O(d_model * 8 B).
    # TODO(synk): apply pipeline_mode=pl.Buffered(1) to rms_w/b_down once
    # verified on the deployed JAX build (kept double-buffered for robustness).
    in_specs = [
        pl.BlockSpec((tm, d_model), lambda i, k: (i, 0)),           # x rows
        pl.BlockSpec((1, d_model), lambda i, k: (0, 0)),            # rms weight
        pl.BlockSpec((None, d_model, tf), lambda i, k: (k, 0, 0)),  # w_up tile
        pl.BlockSpec((1, tf), lambda i, k: (0, k)),                 # b_up tile
    ]
    args = [x2, params["rms_w"], wu, params["b_up"]]
    if use_geglu:
        in_specs += [
            pl.BlockSpec((None, d_model, tf), lambda i, k: (k, 0, 0)),  # w_g tile
            pl.BlockSpec((1, tf), lambda i, k: (0, k)),                 # b_g tile
        ]
        args += [wg, params["b_g"]]
    in_specs += [
        pl.BlockSpec((tf, d_model), lambda i, k: (k, 0)),           # w_down tile
        pl.BlockSpec((1, d_model), lambda i, k: (0, 0)),            # b_down
    ]
    args += [params["w_down"], params["b_down"]]

    # Weights/biases are re-streamed from HBM once per row tile.
    n_row_tiles = n_pad // tm
    n_mm = 3 if use_geglu else 2
    weight_bytes = sum(a.size * a.dtype.itemsize for a in args[1:])
    cost = pl.CostEstimate(
        flops=int(2 * n_pad * d_model * d_ff * n_mm),
        transcendentals=int(n_pad * d_ff),
        bytes_accessed=int(2 * n_pad * d_model * x.dtype.itemsize
                           + weight_bytes * n_row_tiles),
    )

    out = pl.pallas_call(
        kernel,
        out_shape=jax.ShapeDtypeStruct((n_pad, d_model), x.dtype),
        grid_spec=pltpu.PrefetchScalarGridSpec(
            num_scalar_prefetch=0,
            grid=(n_row_tiles, n_k),
            in_specs=in_specs,
            out_specs=pl.BlockSpec((tm, d_model), lambda i, k: (i, 0)),
            scratch_shapes=[
                pltpu.VMEM((tm, d_model), jnp.bfloat16),   # cached x_norm
            ],
        ),
        compiler_params=pltpu.CompilerParams(
            dimension_semantics=("parallel", "arbitrary"),
            vmem_limit_bytes=_vmem_limit_bytes(),
        ),
        cost_estimate=cost,
    )(*args)
    return out[:n].reshape(b, s, d_model)


def init_params(key, d_model, d_ff):
    """Deterministic synthetic params (PyTorch-Linear-like uniform init),
    stored [in, out]; weights bf16 for the MXU, biases / rms weight f32."""
    ks = jax.random.split(key, 6)
    lim_up = 1.0 / jnp.sqrt(d_model)
    lim_down = 1.0 / jnp.sqrt(d_ff)
    u = lambda k, shape, lim: jax.random.uniform(k, shape, jnp.float32, -lim, lim)
    return {
        "rms_w": jnp.ones((1, d_model), jnp.float32),
        "w_up": u(ks[0], (d_model, d_ff), lim_up).astype(jnp.bfloat16),
        "b_up": u(ks[1], (1, d_ff), lim_up),
        "w_g": u(ks[2], (d_model, d_ff), lim_up).astype(jnp.bfloat16),
        "b_g": u(ks[3], (1, d_ff), lim_up),
        "w_down": u(ks[4], (d_ff, d_model), lim_down).astype(jnp.bfloat16),
        "b_down": u(ks[5], (1, d_model), lim_down),
    }


def _reference(x, p, use_geglu):
    eps = float(jnp.finfo(jnp.float32).eps)
    x_norm = x * lax.rsqrt(jnp.mean(x * x, -1, keepdims=True) + eps)
    x_norm = x_norm * p["rms_w"][0]
    h = x_norm @ p["w_up"].astype(jnp.float32) + p["b_up"][0]
    if use_geglu:
        h = h * (x_norm @ p["w_g"].astype(jnp.float32) + p["b_g"][0])
    h = _gelu_exact(h)
    return x + (h @ p["w_down"].astype(jnp.float32) + p["b_down"][0])


if __name__ == "__main__":
    key = jax.random.PRNGKey(0)
    k_x, k_p = jax.random.split(key)

    batch, seq, d_model, d_ff = 2, 8, 32, 64
    x = jax.random.normal(k_x, (batch, seq, d_model), jnp.float32)
    params = init_params(k_p, d_model, d_ff)

    ok = True
    for use_geglu in (True, False):
        y = transformer_mlp(x, params, use_geglu=use_geglu)
        y = jax.block_until_ready(y)
        y_ref = _reference(x, params, use_geglu)
        # bf16 matmul operands (f32 accumulation) -> loosen tolerance vs f32 ref.
        ok &= bool(jnp.allclose(y, y_ref, atol=2e-2, rtol=2e-2))

    print("KERNEL_OK" if ok else "MISMATCH")
</pallas_src>

<mosaic_0001>
module attributes {stable_mosaic.version = 11 : i64} {
  func.func @_mlp_kernel(%arg0: i32, %arg1: i32, %arg2: memref<8x32xf32, #tpu.memory_space<vmem>>, %arg3: memref<1x32xf32, #tpu.memory_space<vmem>>, %arg4: memref<1x32x64xbf16, #tpu.memory_space<vmem>>, %arg5: memref<1x64xf32, #tpu.memory_space<vmem>>, %arg6: memref<1x32x64xbf16, #tpu.memory_space<vmem>>, %arg7: memref<1x64xf32, #tpu.memory_space<vmem>>, %arg8: memref<64x32xbf16, #tpu.memory_space<vmem>>, %arg9: memref<1x32xf32, #tpu.memory_space<vmem>>, %arg10: memref<8x32xf32, #tpu.memory_space<vmem>>, %arg11: memref<8x32xbf16, #tpu.memory_space<vmem>>) attributes {dimension_semantics = [#tpu.dimension_semantics<parallel>, #tpu.dimension_semantics<arbitrary>], iteration_bounds = array<i64: 2, 1>, scalar_prefetch = 0 : i64, scratch_operands = 1 : i64, tpu.core_type = #tpu.core_type<tc>, window_params = [{transform_indices = @transform_0, window_bounds = array<i64: 8, 32>}, {pipeline_mode = #tpu.pipeline_mode<synchronous>, transform_indices = @transform_1, window_bounds = array<i64: 1, 32>}, {transform_indices = @transform_2, window_bounds = array<i64: 1, 32, 64>}, {transform_indices = @transform_3, window_bounds = array<i64: 1, 64>}, {transform_indices = @transform_4, window_bounds = array<i64: 1, 32, 64>}, {transform_indices = @transform_5, window_bounds = array<i64: 1, 64>}, {transform_indices = @transform_6, window_bounds = array<i64: 64, 32>}, {pipeline_mode = #tpu.pipeline_mode<synchronous>, transform_indices = @transform_7, window_bounds = array<i64: 1, 32>}, {transform_indices = @transform_8, window_bounds = array<i64: 8, 32>}]} {
    %c0_i32 = arith.constant 0 : i32
    %0 = arith.cmpi eq, %arg1, %c0_i32 : i32
    %1 = arith.extui %0 : i1 to i32
    %c0_i32_0 = arith.constant 0 : i32
    %2 = arith.cmpi ne, %1, %c0_i32_0 : i32
    scf.if %2 {
      %c0_24 = arith.constant 0 : index
      %c0_25 = arith.constant 0 : index
      %33 = vector.load %arg2[%c0_24, %c0_25] : memref<8x32xf32, #tpu.memory_space<vmem>>, vector<8x32xf32>
      %34 = arith.mulf %33, %33 : vector<8x32xf32>
      %cst_26 = arith.constant dense<0.000000e+00> : vector<8xf32>
      %35 = vector.multi_reduction <add>, %34, %cst_26 [1] : vector<8x32xf32> to vector<8xf32>
      %36 = vector.shape_cast %35 : vector<8xf32> to vector<8x1xf32>
      %cst_27 = arith.constant 3.200000e+01 : f32
      %37 = vector.broadcast %cst_27 : f32 to vector<8x1xf32>
      %38 = arith.divf %36, %37 : vector<8x1xf32>
      %cst_28 = arith.constant 1.1920929E-7 : f32
      %39 = vector.broadcast %cst_28 : f32 to vector<8x1xf32>
      %40 = arith.addf %38, %39 : vector<8x1xf32>
      %41 = math.rsqrt %40 : vector<8x1xf32>
      %42 = vector.broadcast %41 : vector<8x1xf32> to vector<8x32xf32>
      %43 = arith.mulf %33, %42 : vector<8x32xf32>
      %c0_29 = arith.constant 0 : index
      %c0_30 = arith.constant 0 : index
      %44 = vector.load %arg3[%c0_29, %c0_30] : memref<1x32xf32, #tpu.memory_space<vmem>>, vector<1x32xf32>
      %45 = vector.broadcast %44 : vector<1x32xf32> to vector<8x32xf32>
      %46 = arith.mulf %43, %45 : vector<8x32xf32>
      %47 = arith.truncf %46 : vector<8x32xf32> to vector<8x32xbf16>
      %c0_31 = arith.constant 0 : index
      %c0_32 = arith.constant 0 : index
      %48 = vector.load %arg11[%c0_31, %c0_32] : memref<8x32xbf16, #tpu.memory_space<vmem>>, vector<8x32xbf16>
      tpu.vector_store %arg11[%c0_31, %c0_32], %47 {strides = array<i32>} : memref<8x32xbf16, #tpu.memory_space<vmem>>, vector<8x32xbf16>,
      %c0_33 = arith.constant 0 : index
      %c0_34 = arith.constant 0 : index
      %49 = vector.load %arg9[%c0_33, %c0_34] : memref<1x32xf32, #tpu.memory_space<vmem>>, vector<1x32xf32>
      %50 = vector.broadcast %49 : vector<1x32xf32> to vector<8x32xf32>
      %51 = arith.addf %33, %50 : vector<8x32xf32>
      %c0_35 = arith.constant 0 : index
      %c0_36 = arith.constant 0 : index
      %52 = vector.load %arg10[%c0_35, %c0_36] : memref<8x32xf32, #tpu.memory_space<vmem>>, vector<8x32xf32>
      tpu.vector_store %arg10[%c0_35, %c0_36], %51 {strides = array<i32>} : memref<8x32xf32, #tpu.memory_space<vmem>>, vector<8x32xf32>,
    } else {
    }
    %c0 = arith.constant 0 : index
    %c0_1 = arith.constant 0 : index
    %3 = vector.load %arg11[%c0, %c0_1] : memref<8x32xbf16, #tpu.memory_space<vmem>>, vector<8x32xbf16>
    %c0_2 = arith.constant 0 : index
    %c0_3 = arith.constant 0 : index
    %c0_4 = arith.constant 0 : index
    %4 = vector.load %arg4[%c0_2, %c0_3, %c0_4] : memref<1x32x64xbf16, #tpu.memory_space<vmem>>, vector<1x32x64xbf16>
    %5 = vector.shape_cast %4 : vector<1x32x64xbf16> to vector<32x64xbf16>
    %cst = arith.constant dense<0.000000e+00> : vector<8x64xf32>
    %6 = tpu.matmul %3, %5, %cst {dimension_numbers = #tpu.dot_dimension_numbers<[1], [0], [0], [1], [0, 0, 1, 1], [], []>} : vector<8x32xbf16>, vector<32x64xbf16>, vector<8x64xf32> -> vector<8x64xf32>
    %c0_5 = arith.constant 0 : index
    %c0_6 = arith.constant 0 : index
    %7 = vector.load %arg5[%c0_5, %c0_6] : memref<1x64xf32, #tpu.memory_space<vmem>>, vector<1x64xf32>
    %8 = vector.broadcast %7 : vector<1x64xf32> to vector<8x64xf32>
    %9 = arith.addf %6, %8 : vector<8x64xf32>
    %c0_7 = arith.constant 0 : index
    %c0_8 = arith.constant 0 : index
    %c0_9 = arith.constant 0 : index
    %10 = vector.load %arg6[%c0_7, %c0_8, %c0_9] : memref<1x32x64xbf16, #tpu.memory_space<vmem>>, vector<1x32x64xbf16>
    %11 = vector.shape_cast %10 : vector<1x32x64xbf16> to vector<32x64xbf16>
    %cst_10 = arith.constant dense<0.000000e+00> : vector<8x64xf32>
    %12 = tpu.matmul %3, %11, %cst_10 {dimension_numbers = #tpu.dot_dimension_numbers<[1], [0], [0], [1], [0, 0, 1, 1], [], []>} : vector<8x32xbf16>, vector<32x64xbf16>, vector<8x64xf32> -> vector<8x64xf32>
    %c0_11 = arith.constant 0 : index
    %c0_12 = arith.constant 0 : index
    %13 = vector.load %arg7[%c0_11, %c0_12] : memref<1x64xf32, #tpu.memory_space<vmem>>, vector<1x64xf32>
    %14 = vector.broadcast %13 : vector<1x64xf32> to vector<8x64xf32>
    %15 = arith.addf %12, %14 : vector<8x64xf32>
    %16 = arith.mulf %9, %15 : vector<8x64xf32>
    %cst_13 = arith.constant 5.000000e-01 : f32
    %17 = vector.broadcast %cst_13 : f32 to vector<8x64xf32>
    %18 = arith.mulf %17, %16 : vector<8x64xf32>
    %cst_14 = arith.constant 2.000000e+00 : f32
    %19 = math.sqrt %cst_14 : f32
    %cst_15 = arith.constant 1.000000e+00 : f32
    %20 = arith.divf %cst_15, %19 : f32
    %21 = vector.broadcast %20 : f32 to vector<8x64xf32>
    %22 = arith.mulf %16, %21 : vector<8x64xf32>
    %23 = math.erf %22 : vector<8x64xf32>
    %cst_16 = arith.constant 1.000000e+00 : f32
    %24 = vector.broadcast %cst_16 : f32 to vector<8x64xf32>
    %25 = arith.addf %24, %23 : vector<8x64xf32>
    %26 = arith.mulf %18, %25 : vector<8x64xf32>
    %c0_17 = arith.constant 0 : index
    %c0_18 = arith.constant 0 : index
    %27 = vector.load %arg10[%c0_17, %c0_18] : memref<8x32xf32, #tpu.memory_space<vmem>>, vector<8x32xf32>
    %28 = arith.truncf %26 : vector<8x64xf32> to vector<8x64xbf16>
    %c0_19 = arith.constant 0 : index
    %c0_20 = arith.constant 0 : index
    %29 = vector.load %arg8[%c0_19, %c0_20] : memref<64x32xbf16, #tpu.memory_space<vmem>>, vector<64x32xbf16>
    %cst_21 = arith.constant dense<0.000000e+00> : vector<8x32xf32>
    %30 = tpu.matmul %28, %29, %cst_21 {dimension_numbers = #tpu.dot_dimension_numbers<[1], [0], [0], [1], [0, 0, 1, 1], [], []>} : vector<8x64xbf16>, vector<64x32xbf16>, vector<8x32xf32> -> vector<8x32xf32>
    %31 = arith.addf %27, %30 : vector<8x32xf32>
    %c0_22 = arith.constant 0 : index
    %c0_23 = arith.constant 0 : index
    %32 = vector.load %arg10[%c0_22, %c0_23] : memref<8x32xf32, #tpu.memory_space<vmem>>, vector<8x32xf32>
    tpu.vector_store %arg10[%c0_22, %c0_23], %31 {strides = array<i32>} : memref<8x32xf32, #tpu.memory_space<vmem>>, vector<8x32xf32>,
    return
  }
  func.func @transform_0(%arg0: i32, %arg1: i32) -> (i32, i32) {
    %c0_i32 = arith.constant 0 : i32
    %c0_i32_0 = arith.constant 0 : i32
    return %arg0, %c0_i32 : i32, i32
  }
  func.func @transform_1(%arg0: i32, %arg1: i32) -> (i32, i32) {
    %c0_i32 = arith.constant 0 : i32
    %c0_i32_0 = arith.constant 0 : i32
    %c0_i32_1 = arith.constant 0 : i32
    return %c0_i32, %c0_i32_0 : i32, i32
  }
  func.func @transform_2(%arg0: i32, %arg1: i32) -> (i32, i32, i32) {
    %c0_i32 = arith.constant 0 : i32
    %c0_i32_0 = arith.constant 0 : i32
    %c0_i32_1 = arith.constant 0 : i32
    return %arg1, %c0_i32, %c0_i32_0 : i32, i32, i32
  }
  func.func @transform_3(%arg0: i32, %arg1: i32) -> (i32, i32) {
    %c0_i32 = arith.constant 0 : i32
    %c0_i32_0 = arith.constant 0 : i32
    return %c0_i32, %arg1 : i32, i32
  }
  func.func @transform_4(%arg0: i32, %arg1: i32) -> (i32, i32, i32) {
    %c0_i32 = arith.constant 0 : i32
    %c0_i32_0 = arith.constant 0 : i32
    %c0_i32_1 = arith.constant 0 : i32
    return %arg1, %c0_i32, %c0_i32_0 : i32, i32, i32
  }
  func.func @transform_5(%arg0: i32, %arg1: i32) -> (i32, i32) {
    %c0_i32 = arith.constant 0 : i32
    %c0_i32_0 = arith.constant 0 : i32
    return %c0_i32, %arg1 : i32, i32
  }
  func.func @transform_6(%arg0: i32, %arg1: i32) -> (i32, i32) {
    %c0_i32 = arith.constant 0 : i32
    %c0_i32_0 = arith.constant 0 : i32
    return %arg1, %c0_i32 : i32, i32
  }
  func.func @transform_7(%arg0: i32, %arg1: i32) -> (i32, i32) {
    %c0_i32 = arith.constant 0 : i32
    %c0_i32_0 = arith.constant 0 : i32
    %c0_i32_1 = arith.constant 0 : i32
    return %c0_i32, %c0_i32_0 : i32, i32
  }
  func.func @transform_8(%arg0: i32, %arg1: i32) -> (i32, i32) {
    %c0_i32 = arith.constant 0 : i32
    %c0_i32_0 = arith.constant 0 : i32
    return %arg0, %c0_i32 : i32, i32
  }
}

</mosaic_0001>

<llo_original>
// kernel: tpu_custom_call.1
$region0: #{tpu_custom_call.1}
  #allocation0 [shape = 'u32[]', space=smem, size = 0x4, offset = 0x4, fixed_abs, tag = 'smem constant byte address 0x4 - core index']
  #allocation1 [shape = 'u32[144,128]{1,0:T(1,128)}', space=vmem, size = 0x12000, scoped, tag = 'internal scratch']
  #allocation2 [shape = 'bf16[8,32]{1,0:T(8,128)(2,1)}', space=vmem, size = 0x800, scoped, tag = 'scratch operand']
  %s0 = inlined_call_operand.vmem [shape: f32[16,32], index: 0, kind: input, shape index: {}]
  %s1 = inlined_call_operand.vmem [shape: f32[1,32], index: 1, kind: input, shape index: {}]
  %s2 = inlined_call_operand.vmem [shape: bf16[1,32,64], index: 2, kind: input, shape index: {}]
  %s3 = inlined_call_operand.vmem [shape: f32[1,64], index: 3, kind: input, shape index: {}]
  %s4 = inlined_call_operand.vmem [shape: bf16[1,32,64], index: 4, kind: input, shape index: {}]
  %s5 = inlined_call_operand.vmem [shape: f32[1,64], index: 5, kind: input, shape index: {}]
  %s6 = inlined_call_operand.vmem [shape: bf16[64,32], index: 6, kind: input, shape index: {}]
  %s7 = inlined_call_operand.vmem [shape: f32[1,32], index: 7, kind: input, shape index: {}]
  %s8 = inlined_call_operand.hbm [shape: f32[16,32], index: 8, kind: output, shape index: {}]
  %s9 = sld [smem:[#allocation0]]
  $region69: #{tpu_custom_call.1} parent=0
    _
  %s11 = ssub.s32 1, %s9
  %s12 = scalar_select 0, %s11, %s9
  $region1: #{tpu_custom_call.1} parent=0
    #allocation3 [shape = 'u8[8192]{0}', space=vmem, size = 0x2000, scoped, tag = 'output window, operand 0']
    #allocation4 [shape = 's32[2]{0}', space=sflag, size = 0x8, scoped, tag = 'scoped memory for tpu_custom_call.1']
    %13 = vsyncpa [#allocation4], 0
    %s14 = scalar_lea.sflag [#allocation4], 1
    %15 = vsyncpa %s14, 0
    loop: start=0, step=1, limit=4
    $region2: #{tpu_custom_call.1} parent=1 // loop_pre_header
      _
    $region3: #{tpu_custom_call.1} parent=1 // loop_header
      %s17 = sphi 0, %s21
      %p18 = scmp.ge.s32.totalorder %s17, 4
      %s24 = sphi 0, %s36
      %s25 = sphi 0, %s32
      %s26 = sphi 0, %s24
      %s27 = sphi 0, %s25
      %s28 = sphi 0, %s26
      %s29 = sphi 0, %s27
      %s39 = sphi 0, %s41
      %s42 = sphi 0, %s39
      %s43 = sphi 0, %s42
      %s59 = sphi 0, %s43
      %s63 = sphi 0, %s63
      %s65 = sphi 0, %s63
      %s66 = sphi 0, %s65
      %s80 = sphi 0, %s66
      %s86 = sphi 0, %s88
      %s89 = sphi 0, %s86
      %s90 = sphi 0, %s89
      %s106 = sphi 0, %s90
      %s112 = sphi 0, %s114
      %s115 = sphi 0, %s112
      %s116 = sphi 0, %s115
      %s132 = sphi 0, %s116
      %s138 = sphi 0, %s140
      %s141 = sphi 0, %s138
      %s142 = sphi 0, %s141
      %s158 = sphi 0, %s142
      %s164 = sphi 0, %s166
      %s167 = sphi 0, %s164
      %s168 = sphi 0, %s167
      %s184 = sphi 0, %s168
      %s190 = sphi 0, %s192
      %s193 = sphi 0, %s190
      %s194 = sphi 0, %s193
      %s210 = sphi 0, %s194
      %s214 = sphi 0, %s214
      %s216 = sphi 0, %s214
      %s217 = sphi 0, %s216
      %s231 = sphi 0, %s217
      %s237 = sphi 0, %s239
      %s240 = sphi 0, %s237
      %s241 = sphi 0, %s240
      %s257 = sphi 0, %s241
    $region4: #{tpu_custom_call.1} parent=1 // loop_header_branch
      %20 = sbr.rel (%p18) target = $region8
    $region5: #{tpu_custom_call.1} parent=1 // loop_body
      %s22 = ssub.s32 %s17, 1
      %s23 = ssub.s32 %s17, 2
      %s30 = sadd.s32 1, %s25
      %p31 = scmp.ge.s32.totalorder %s30, 1
      %s32 = scalar_select %p31, 0, %s30
      %s33 = sadd.s32 1, %s24
      %s34 = scalar_select %p31, %s33, %s24
      %p35 = scmp.ge.s32.totalorder %s34, 2
      %s36 = scalar_select %p35, 0, %s34
      %s37 = ssub.s32 %s24, %s36
      %p38 = scmp.eq.s32.totalorder %s37, 0
      %s40 = sadd.s32 %s39, 1
      %s41 = scalar_select %p38, %s39, %s40
      %p44 = pneg %p38
      %p45 = scmp.eq.s32.totalorder %s17, 1
      %p46 = por %p44, %p45
      %p47 = scmp.ne.s32.totalorder %s39, %s42
      %p48 = scmp.eq.s32.totalorder %s17, 0
      %p49 = por %p47, %p48
      %p50 = scmp.ne.s32.totalorder %s39, %s42
      %p51 = scmp.eq.s32.totalorder %s22, 1
      %p52 = por %p50, %p51
      %p53 = scmp.ne.s32.totalorder %s42, %s43
      %p54 = scmp.eq.s32.totalorder %s22, 0
      %p55 = por %p53, %p54
      %p56 = scmp.ne.s32.totalorder %s42, %s43
      %p57 = scmp.eq.s32.totalorder %s23, 1
      %p58 = por %p56, %p57
      %p60 = scmp.ne.s32.totalorder %s43, %s59
      %p61 = scmp.eq.s32.totalorder %s23, 0
      %p62 = por %p60, %p61
      %s64 = sadd.s32 %s63, 1
      %p67 = scmp.eq.s32.totalorder %s17, 1
      %p68 = scmp.ne.s32.totalorder %s63, %s65
      %p69 = scmp.eq.s32.totalorder %s17, 0
      %p70 = por %p68, %p69
      %p71 = scmp.ne.s32.totalorder %s63, %s65
      %p72 = scmp.eq.s32.totalorder %s22, 1
      %p73 = por %p71, %p72
      %p74 = scmp.ne.s32.totalorder %s65, %s66
      %p75 = scmp.eq.s32.totalorder %s22, 0
      %p76 = por %p74, %p75
      %p77 = scmp.ne.s32.totalorder %s65, %s66
      %p78 = scmp.eq.s32.totalorder %s23, 1
      %p79 = por %p77, %p78
      %p81 = scmp.ne.s32.totalorder %s66, %s80
      %p82 = scmp.eq.s32.totalorder %s23, 0
      %p83 = por %p81, %p82
      %s84 = ssub.s32 %s25, %s32
      %p85 = scmp.eq.s32.totalorder %s84, 0
      %s87 = sadd.s32 %s86, 1
      %s88 = scalar_select %p85, %s86, %s87
      %p91 = pneg %p85
      %p92 = scmp.eq.s32.totalorder %s17, 1
      %p93 = por %p91, %p92
      %p94 = scmp.ne.s32.totalorder %s86, %s89
      %p95 = scmp.eq.s32.totalorder %s17, 0
      %p96 = por %p94, %p95
      %p97 = scmp.ne.s32.totalorder %s86, %s89
      %p98 = scmp.eq.s32.totalorder %s22, 1
      %p99 = por %p97, %p98
      %p100 = scmp.ne.s32.totalorder %s89, %s90
      %p101 = scmp.eq.s32.totalorder %s22, 0
      %p102 = por %p100, %p101
      %p103 = scmp.ne.s32.totalorder %s89, %s90
      %p104 = scmp.eq.s32.totalorder %s23, 1
      %p105 = por %p103, %p104
      %p107 = scmp.ne.s32.totalorder %s90, %s106
      %p108 = scmp.eq.s32.totalorder %s23, 0
      %p109 = por %p107, %p108
      %s110 = ssub.s32 %s25, %s32
      %p111 = scmp.eq.s32.totalorder %s110, 0
      %s113 = sadd.s32 %s112, 1
      %s114 = scalar_select %p111, %s112, %s113
      %p117 = pneg %p111
      %p118 = scmp.eq.s32.totalorder %s17, 1
      %p119 = por %p117, %p118
      %p120 = scmp.ne.s32.totalorder %s112, %s115
      %p121 = scmp.eq.s32.totalorder %s17, 0
      %p122 = por %p120, %p121
      %p123 = scmp.ne.s32.totalorder %s112, %s115
      %p124 = scmp.eq.s32.totalorder %s22, 1
      %p125 = por %p123, %p124
      %p126 = scmp.ne.s32.totalorder %s115, %s116
      %p127 = scmp.eq.s32.totalorder %s22, 0
      %p128 = por %p126, %p127
      %p129 = scmp.ne.s32.totalorder %s115, %s116
      %p130 = scmp.eq.s32.totalorder %s23, 1
      %p131 = por %p129, %p130
      %p133 = scmp.ne.s32.totalorder %s116, %s132
      %p134 = scmp.eq.s32.totalorder %s23, 0
      %p135 = por %p133, %p134
      %s136 = ssub.s32 %s25, %s32
      %p137 = scmp.eq.s32.totalorder %s136, 0
      %s139 = sadd.s32 %s138, 1
      %s140 = scalar_select %p137, %s138, %s139
      %p143 = pneg %p137
      %p144 = scmp.eq.s32.totalorder %s17, 1
      %p145 = por %p143, %p144
      %p146 = scmp.ne.s32.totalorder %s138, %s141
      %p147 = scmp.eq.s32.totalorder %s17, 0
      %p148 = por %p146, %p147
      %p149 = scmp.ne.s32.totalorder %s138, %s141
      %p150 = scmp.eq.s32.totalorder %s22, 1
      %p151 = por %p149, %p150
      %p152 = scmp.ne.s32.totalorder %s141, %s142
      %p153 = scmp.eq.s32.totalorder %s22, 0
      %p154 = por %p152, %p153
      %p155 = scmp.ne.s32.totalorder %s141, %s142
      %p156 = scmp.eq.s32.totalorder %s23, 1
      %p157 = por %p155, %p156
      %p159 = scmp.ne.s32.totalorder %s142, %s158
      %p160 = scmp.eq.s32.totalorder %s23, 0
      %p161 = por %p159, %p160
      %s162 = ssub.s32 %s25, %s32
      %p163 = scmp.eq.s32.totalorder %s162, 0
      %s165 = sadd.s32 %s164, 1
      %s166 = scalar_select %p163, %s164, %s165
      %p169 = pneg %p163
      %p170 = scmp.eq.s32.totalorder %s17, 1
      %p171 = por %p169, %p170
      %p172 = scmp.ne.s32.totalorder %s164, %s167
      %p173 = scmp.eq.s32.totalorder %s17, 0
      %p174 = por %p172, %p173
      %p175 = scmp.ne.s32.totalorder %s164, %s167
      %p176 = scmp.eq.s32.totalorder %s22, 1
      %p177 = por %p175, %p176
      %p178 = scmp.ne.s32.totalorder %s167, %s168
      %p179 = scmp.eq.s32.totalorder %s22, 0
      %p180 = por %p178, %p179
      %p181 = scmp.ne.s32.totalorder %s167, %s168
      %p182 = scmp.eq.s32.totalorder %s23, 1
      %p183 = por %p181, %p182
      %p185 = scmp.ne.s32.totalorder %s168, %s184
      %p186 = scmp.eq.s32.totalorder %s23, 0
      %p187 = por %p185, %p186
      %s188 = ssub.s32 %s25, %s32
      %p189 = scmp.eq.s32.totalorder %s188, 0
      %s191 = sadd.s32 %s190, 1
      %s192 = scalar_select %p189, %s190, %s191
      %p195 = pneg %p189
      %p196 = scmp.eq.s32.totalorder %s17, 1
      %p197 = por %p195, %p196
      %p198 = scmp.ne.s32.totalorder %s190, %s193
      %p199 = scmp.eq.s32.totalorder %s17, 0
      %p200 = por %p198, %p199
      %p201 = scmp.ne.s32.totalorder %s190, %s193
      %p202 = scmp.eq.s32.totalorder %s22, 1
      %p203 = por %p201, %p202
      %p204 = scmp.ne.s32.totalorder %s193, %s194
      %p205 = scmp.eq.s32.totalorder %s22, 0
      %p206 = por %p204, %p205
      %p207 = scmp.ne.s32.totalorder %s193, %s194
      %p208 = scmp.eq.s32.totalorder %s23, 1
      %p209 = por %p207, %p208
      %p211 = scmp.ne.s32.totalorder %s194, %s210
      %p212 = scmp.eq.s32.totalorder %s23, 0
      %p213 = por %p211, %p212
      %s215 = sadd.s32 %s214, 1
      %p218 = scmp.eq.s32.totalorder %s17, 1
      %p219 = scmp.ne.s32.totalorder %s214, %s216
      %p220 = scmp.eq.s32.totalorder %s17, 0
      %p221 = por %p219, %p220
      %p222 = scmp.ne.s32.totalorder %s214, %s216
      %p223 = scmp.eq.s32.totalorder %s22, 1
      %p224 = por %p222, %p223
      %p225 = scmp.ne.s32.totalorder %s216, %s217
      %p226 = scmp.eq.s32.totalorder %s22, 0
      %p227 = por %p225, %p226
      %p228 = scmp.ne.s32.totalorder %s216, %s217
      %p229 = scmp.eq.s32.totalorder %s23, 1
      %p230 = por %p228, %p229
      %p232 = scmp.ne.s32.totalorder %s217, %s231
      %p233 = scmp.eq.s32.totalorder %s23, 0
      %p234 = por %p232, %p233
      %s235 = ssub.s32 %s24, %s36
      %p236 = scmp.eq.s32.totalorder %s235, 0
      %s238 = sadd.s32 %s237, 1
      %s239 = scalar_select %p236, %s237, %s238
      %p242 = pneg %p236
      %p243 = scmp.eq.s32.totalorder %s17, 1
      %p244 = por %p242, %p243
      %p245 = scmp.ne.s32.totalorder %s237, %s240
      %p246 = scmp.eq.s32.totalorder %s17, 0
      %p247 = por %p245, %p246
      %p248 = scmp.ne.s32.totalorder %s237, %s240
      %p249 = scmp.eq.s32.totalorder %s22, 1
      %p250 = por %p248, %p249
      %p251 = scmp.ne.s32.totalorder %s240, %s241
      %p252 = scmp.eq.s32.totalorder %s22, 0
      %p253 = por %p251, %p252
      %p254 = scmp.ne.s32.totalorder %s240, %s241
      %p255 = scmp.eq.s32.totalorder %s23, 1
      %p256 = por %p254, %p255
      %p258 = scmp.ne.s32.totalorder %s241, %s257
      %p259 = scmp.eq.s32.totalorder %s23, 0
      %p260 = por %p258, %p259
      %p261 = scmp.le.s32.totalorder 1, %s17
      %p262 = scmp.lt.s32.totalorder %s17, 3
      %p263 = pnand %p261, %p262
      %p264 = pneg %p263
      // Predicated region
      $region9: #{tpu_custom_call.1} parent=5 // pred_check
        _
      $region10: #{tpu_custom_call.1} parent=5 // pred_check_branch
        %266 = sbr.rel (%p263) target = $region12
      $region11: #{tpu_custom_call.1} parent=5 // pred_region
        %s267 = ssub.s32 %s17, 1
        // Predicated region
        $region13: #{tpu_custom_call.1} parent=11 // pred_check
          %p268 = pneg %p76
        $region14: #{tpu_custom_call.1} parent=11 // pred_check_branch
          %270 = sbr.rel (%p268) target = $region16
        $region15: #{tpu_custom_call.1} parent=11 // pred_region
          _
        $region16: #{tpu_custom_call.1} parent=11 // pred_fallthru
          _
        // Predicated region
        $region17: #{tpu_custom_call.1} parent=11 // pred_check
          %p271 = pneg %p102
        $region18: #{tpu_custom_call.1} parent=11 // pred_check_branch
          %273 = sbr.rel (%p271) target = $region20
        $region19: #{tpu_custom_call.1} parent=11 // pred_region
          %p274 = scmp.lt.s32.totalorder %s27, 0
          %s275 = scalar_select %p274, %s27, 0
          %s276 = smul.addr %s275, 4
          %s277 = smul.addr %s276, 4
          %s278 = scalar_lea.vmem %s2, %s277
        $region20: #{tpu_custom_call.1} parent=11 // pred_fallthru
          _
        // Predicated region
        $region21: #{tpu_custom_call.1} parent=11 // pred_check
          %p279 = pneg %p128
        $region22: #{tpu_custom_call.1} parent=11 // pred_check_branch
          %281 = sbr.rel (%p279) target = $region24
        $region23: #{tpu_custom_call.1} parent=11 // pred_region
          %p282 = scmp.lt.s32.totalorder %s27, 0
          %s283 = scalar_select %p282, %s27, 0
          %s284 = scalar_lea.vmem %s3, %s283
        $region24: #{tpu_custom_call.1} parent=11 // pred_fallthru
          _
        // Predicated region
        $region25: #{tpu_custom_call.1} parent=11 // pred_check
          %p285 = pneg %p154
        $region26: #{tpu_custom_call.1} parent=11 // pred_check_branch
          %287 = sbr.rel (%p285) target = $region28
        $region27: #{tpu_custom_call.1} parent=11 // pred_region
          %p288 = scmp.lt.s32.totalorder %s27, 0
          %s289 = scalar_select %p288, %s27, 0
          %s290 = smul.addr %s289, 4
          %s291 = smul.addr %s290, 4
          %s292 = scalar_lea.vmem %s4, %s291
        $region28: #{tpu_custom_call.1} parent=11 // pred_fallthru
          _
        // Predicated region
        $region29: #{tpu_custom_call.1} parent=11 // pred_check
          %p293 = pneg %p180
        $region30: #{tpu_custom_call.1} parent=11 // pred_check_branch
          %295 = sbr.rel (%p293) target = $region32
        $region31: #{tpu_custom_call.1} parent=11 // pred_region
          %p296 = scmp.lt.s32.totalorder %s27, 0
          %s297 = scalar_select %p296, %s27, 0
          %s298 = scalar_lea.vmem %s5, %s297
        $region32: #{tpu_custom_call.1} parent=11 // pred_fallthru
          _
        // Predicated region
        $region33: #{tpu_custom_call.1} parent=11 // pred_check
          %p299 = pneg %p206
        $region34: #{tpu_custom_call.1} parent=11 // pred_check_branch
          %301 = sbr.rel (%p299) target = $region36
        $region35: #{tpu_custom_call.1} parent=11 // pred_region
          %s302 = smul.u32 8, %s27
          %p303 = scmp.lt.s32.totalorder %s302, 7
          %s304 = scalar_select %p303, %s302, 7
          %s305 = smul.addr %s304, 4
          %s306 = scalar_lea.vmem %s6, %s305
          %s307 = smul.u32 8, %s27
        $region36: #{tpu_custom_call.1} parent=11 // pred_fallthru
          _
        // Predicated region
        $region37: #{tpu_custom_call.1} parent=11 // pred_check
          %p308 = pneg %p227
        $region38: #{tpu_custom_call.1} parent=11 // pred_check_branch
          %310 = sbr.rel (%p308) target = $region40
        $region39: #{tpu_custom_call.1} parent=11 // pred_region
          _
        $region40: #{tpu_custom_call.1} parent=11 // pred_fallthru
          _
      $region12: #{tpu_custom_call.1} parent=5 // pred_fallthru
        _
      %p311 = scmp.lt.s32.totalorder %s17, 2
      // Predicated region
      $region41: #{tpu_custom_call.1} parent=5 // pred_check
        %p312 = pneg %p311
      $region42: #{tpu_custom_call.1} parent=5 // pred_check_branch
        %314 = sbr.rel (%p312) target = $region44
      $region43: #{tpu_custom_call.1} parent=5 // pred_region
        // Predicated region
        $region45: #{tpu_custom_call.1} parent=43 // pred_check
          %p315 = pneg %p49
        $region46: #{tpu_custom_call.1} parent=43 // pred_check_branch
          %317 = sbr.rel (%p315) target = $region48
        $region47: #{tpu_custom_call.1} parent=43 // pred_region
          %p318 = scmp.lt.s32.totalorder %s24, 1
          %s319 = scalar_select %p318, %s24, 1
          %s320 = smul.addr %s319, 8
          %s321 = scalar_lea.vmem %s0, %s320
        $region48: #{tpu_custom_call.1} parent=43 // pred_fallthru
          _
      $region44: #{tpu_custom_call.1} parent=5 // pred_fallthru
        _
      %p322 = scmp.le.s32.totalorder 1, %s17
      %p323 = scmp.lt.s32.totalorder %s17, 3
      %p324 = pnand %p322, %p323
      %p325 = pneg %p324
      // Predicated region
      $region49: #{tpu_custom_call.1} parent=5 // pred_check
        _
      $region50: #{tpu_custom_call.1} parent=5 // pred_check_branch
        %327 = sbr.rel (%p324) target = $region52
      $region51: #{tpu_custom_call.1} parent=5 // pred_region
        %s328 = ssub.s32 %s17, 1
        %p329 = scmp.lt.s32.totalorder %s26, 1
        %s330 = scalar_select %p329, %s26, 1
        %s331 = smul.addr %s330, 8
        %s332 = scalar_lea.vmem %s0, %s331
        %p333 = pneg %p55
        %p334 = pneg %p52
        %p335 = pneg %p76
        %p336 = pneg %p73
        %p337 = scmp.lt.s32.totalorder %s27, 0
        %s338 = scalar_select %p337, %s27, 0
        %s339 = smul.addr %s338, 4
        %s340 = smul.addr %s339, 4
        %s341 = scalar_lea.vmem %s2, %s340
        %p342 = pneg %p102
        %p343 = pneg %p99
        %p344 = scmp.lt.s32.totalorder %s27, 0
        %s345 = scalar_select %p344, %s27, 0
        %s346 = scalar_lea.vmem %s3, %s345
        %p347 = pneg %p128
        %p348 = pneg %p125
        %p349 = scmp.lt.s32.totalorder %s27, 0
        %s350 = scalar_select %p349, %s27, 0
        %s351 = smul.addr %s350, 4
        %s352 = smul.addr %s351, 4
        %s353 = scalar_lea.vmem %s4, %s352
        %p354 = pneg %p154
        %p355 = pneg %p151
        %p356 = scmp.lt.s32.totalorder %s27, 0
        %s357 = scalar_select %p356, %s27, 0
        %s358 = scalar_lea.vmem %s5, %s357
        %p359 = pneg %p180
        %p360 = pneg %p177
        %s361 = smul.u32 8, %s27
        %p362 = scmp.lt.s32.totalorder %s361, 7
        %s363 = scalar_select %p362, %s361, 7
        %s364 = smul.addr %s363, 4
        %s365 = scalar_lea.vmem %s6, %s364
        %p366 = pneg %p206
        %p367 = pneg %p203
        %p368 = pneg %p227
        %p369 = pneg %p224
        %p370 = pneg %p253
        %p371 = pneg %p250
        %s372 = sand.u32 %s240, 1
        %s373 = scalar_lea.sflag [#allocation4], %s372
        %s374 = sand.u32 %s240, 1
        %s375 = smul.addr %s374, 8
        %s376 = scalar_lea.vmem [#allocation3], %s375
        %p377 = scmp.lt.s32.totalorder %s26, 1
        %s378 = scalar_select %p377, %s26, 1
        %s379 = smul.addr %s378, 8
        %s380 = scalar_lea.vmem %s0, %s379
        %p381 = scmp.lt.s32.totalorder %s27, 0
        %s382 = scalar_select %p381, %s27, 0
        %s383 = smul.addr %s382, 4
        %s384 = smul.addr %s383, 4
        %s385 = scalar_lea.vmem %s2, %s384
        %p386 = scmp.lt.s32.totalorder %s27, 0
        %s387 = scalar_select %p386, %s27, 0
        %s388 = scalar_lea.vmem %s3, %s387
        %p389 = scmp.lt.s32.totalorder %s27, 0
        %s390 = scalar_select %p389, %s27, 0
        %s391 = smul.addr %s390, 4
        %s392 = smul.addr %s391, 4
        %s393 = scalar_lea.vmem %s4, %s392
        %p394 = scmp.lt.s32.totalorder %s27, 0
        %s395 = scalar_select %p394, %s27, 0
        %s396 = scalar_lea.vmem %s5, %s395
        %s397 = smul.u32 8, %s27
        %p398 = scmp.lt.s32.totalorder %s397, 7
        %s399 = scalar_select %p398, %s397, 7
        %s400 = smul.addr %s399, 4
        %s401 = scalar_lea.vmem %s6, %s400
        %s402 = smul.u32 8, %s27
        %p404 = scmp.eq.s32.totalorder %s27, 0
        // Predicated region
        $region53: #{tpu_custom_call.1} parent=51 // pred_check
          %p405 = pneg %p404
        $region54: #{tpu_custom_call.1} parent=51 // pred_check_branch
          %407 = sbr.rel (%p405) target = $region56
        $region55: #{tpu_custom_call.1} parent=51 // pred_region
          %v408 = vld [vmem:[%s380] sm:$0xff]
          %v409 = vmul.f32 %v408, %v408
          %vm410 = vcmask 261120
          %v411 = vsel %vm410, %v409, 0.0
          %412 = vadd.xlane.f32.xlu0 %v411
          %v413 = vpop.xlane.xlu0 %412
          %v414 = vrcp.pop 32.0
          %v415 = vmul.f32 %v413, %v414
          %v416 = vadd.f32 %v415, 1.1920929e-07
          %v417 = vrsqrt.pop %v416
          %v418 = vmul.f32 %v408, %v417
          %v419 = vld [vmem:[%s1] sm:$0x1]
          %v421 = vlaneseq
          %v422 = vshrl.u32 %v421, 7
          %v423 = vsub.s32 0, %v422
          %v424 = vrot.slane %v419, %v423
          %v426 = vmul.f32 %v418, %v424
          %v427 = vpack.c.bf16 %v426, %v426
          %vm428 = vcmask 257024
          %429 = vst.msk [vmem:[#allocation2] sm:$0xf] %vm428, %v427
          %v430 = vld [vmem:[%s7] sm:$0x1]
          %v432 = vlaneseq
          %v433 = vshrl.u32 %v432, 7
          %v434 = vsub.s32 0, %v433
          %v435 = vrot.slane %v430, %v434
          %v437 = vadd.f32 %v408, %v435
          %438 = vst.msk [vmem:[%s376] sm:$0xff] %vm410, %v437
        $region56: #{tpu_custom_call.1} parent=51 // pred_fallthru
          _
        %v439 = vld [vmem:[#allocation2] sm:$0xf]
        %v440 = vld [vmem:[%s385] sm:$0xf]
        %v441 = vld [vmem:[%s385 + $0x4] sm:$0xf]
        %v442 = vld [vmem:[%s385 + $0x8] sm:$0xf]
        %v443 = vld [vmem:[%s385 + $0xc] sm:$0xf]
        %v444 = vld [vmem:[%s388] sm:$0x1]
        %v446 = vlaneseq
        %v447 = vshrl.u32 %v446, 7
        %v448 = vsub.s32 0, %v447
        %v449 = vrot.slane %v444, %v448
        %v455 = vunpack.c.l.b16 %v440
        %v456 = vunpack.c.l.b16 %v441
        %v457 = vunpack.c.l.b16 %v442
        %v458 = vunpack.c.l.b16 %v443
        %v459 = vpack.c.b16 %v456, %v455
        %v460 = vpack.c.b16 %v458, %v457
        %vm463 = vcmask 261120
        %v465 = vsel %vm463, %v439, 0
        %467 = vmatprep.subr.bf16.mxu0 0
        %468 = vmatpush1.bf16.msra.mxu0 %v459
        %469 = vmatprep.subr.bf16.mxu0 0
        %470 = vmatpush1.bf16.msra.mxu0 %v460
        %471 = vmatprep.subr.bf16.mxu0 0
        %472 = vmatpush1.bf16.msra.mxu0 0
        %473 = vmatprep.subr.bf16.mxu0 0
        %474 = vmatpush1.bf16.msra.mxu0 0
        %475 = vmatprep.subr.bf16.mxu0 0
        %476 = vmatpush1.bf16.msra.mxu0 0
        %477 = vmatprep.subr.bf16.mxu0 0
        %478 = vmatpush1.bf16.msra.mxu0 0
        %479 = vmatprep.subr.bf16.mxu0 0
        %480 = vmatpush1.bf16.msra.mxu0 0
        %481 = vmatprep.subr.bf16.mxu0 0
        %482 = vmatpush1.bf16.msra.mxu0 0
        %483 = vmatprep.subr.bf16.mxu0 0
        %484 = vmatpush1.bf16.msra.mxu0 0
        %485 = vmatprep.subr.bf16.mxu0 0
        %486 = vmatpush1.bf16.msra.mxu0 0
        %487 = vmatprep.subr.bf16.mxu0 0
        %488 = vmatpush1.bf16.msra.mxu0 0
        %489 = vmatprep.subr.bf16.mxu0 0
        %490 = vmatpush1.bf16.msra.mxu0 0
        %491 = vmatprep.subr.bf16.mxu0 0
        %492 = vmatpush1.bf16.msra.mxu0 0
        %493 = vmatprep.subr.bf16.mxu0 0
        %494 = vmatpush1.bf16.msra.mxu0 0
        %495 = vmatprep.subr.bf16.mxu0 0
        %496 = vmatpush1.bf16.msra.mxu0 0
        %497 = vmatprep.subr.bf16.mxu0 0
        %498 = vmatpush1.bf16.msra.mxu0 0
        %499 = vmatprep.mubr.bf16.mxu0 0
        %500 = vmatmul.mubr.bf16.gmra.mrb[0].mxu0 %v465
        %v501 = vpop.f32.mrb[0].mxu0
        %v502 = vadd.f32 %v449, %v501
        %v503 = vpop.f32.mrb[0].mxu0
        %v504 = vpop.f32.mrb[0].mxu0
        %v505 = vpop.f32.mrb[0].mxu0
        %506 = vdwg.mxu0
        %v507 = vld [vmem:[%s393] sm:$0xf]
        %v508 = vld [vmem:[%s393 + $0x4] sm:$0xf]
        %v509 = vld [vmem:[%s393 + $0x8] sm:$0xf]
        %v510 = vld [vmem:[%s393 + $0xc] sm:$0xf]
        %v511 = vld [vmem:[%s396] sm:$0x1]
        %v513 = vlaneseq
        %v514 = vshrl.u32 %v513, 7
        %v515 = vsub.s32 0, %v514
        %v516 = vrot.slane %v511, %v515
        %v522 = vunpack.c.l.b16 %v507
        %v523 = vunpack.c.l.b16 %v508
        %v524 = vunpack.c.l.b16 %v509
        %v525 = vunpack.c.l.b16 %v510
        %v526 = vpack.c.b16 %v523, %v522
        %v527 = vpack.c.b16 %v525, %v524
        %530 = vmatprep.subr.bf16.mxu0 0
        %531 = vmatpush1.bf16.msra.mxu0 %v526
        %532 = vmatprep.subr.bf16.mxu0 0
        %533 = vmatpush1.bf16.msra.mxu0 %v527
        %534 = vmatprep.subr.bf16.mxu0 0
        %535 = vmatpush1.bf16.msra.mxu0 0
        %536 = vmatprep.subr.bf16.mxu0 0
        %537 = vmatpush1.bf16.msra.mxu0 0
        %538 = vmatprep.subr.bf16.mxu0 0
        %539 = vmatpush1.bf16.msra.mxu0 0
        %540 = vmatprep.subr.bf16.mxu0 0
        %541 = vmatpush1.bf16.msra.mxu0 0
        %542 = vmatprep.subr.bf16.mxu0 0
        %543 = vmatpush1.bf16.msra.mxu0 0
        %544 = vmatprep.subr.bf16.mxu0 0
        %545 = vmatpush1.bf16.msra.mxu0 0
        %546 = vmatprep.subr.bf16.mxu0 0
        %547 = vmatpush1.bf16.msra.mxu0 0
        %548 = vmatprep.subr.bf16.mxu0 0
        %549 = vmatpush1.bf16.msra.mxu0 0
        %550 = vmatprep.subr.bf16.mxu0 0
        %551 = vmatpush1.bf16.msra.mxu0 0
        %552 = vmatprep.subr.bf16.mxu0 0
        %553 = vmatpush1.bf16.msra.mxu0 0
        %554 = vmatprep.subr.bf16.mxu0 0
        %555 = vmatpush1.bf16.msra.mxu0 0
        %556 = vmatprep.subr.bf16.mxu0 0
        %557 = vmatpush1.bf16.msra.mxu0 0
        %558 = vmatprep.subr.bf16.mxu0 0
        %559 = vmatpush1.bf16.msra.mxu0 0
        %560 = vmatprep.subr.bf16.mxu0 0
        %561 = vmatpush1.bf16.msra.mxu0 0
        %562 = vmatprep.mubr.bf16.mxu0 0
        %563 = vmatmul.mubr.bf16.gmra.mrb[0].mxu0 %v465
        %v564 = vpop.f32.mrb[0].mxu0
        %v565 = vadd.f32 %v516, %v564
        %v566 = vpop.f32.mrb[0].mxu0
        %v567 = vpop.f32.mrb[0].mxu0
        %v568 = vpop.f32.mrb[0].mxu0
        %569 = vdwg.mxu0
        %v570 = vmul.f32 %v502, %v565
        %v571 = vmul.f32 %v570, 0.5
        %v572 = vmul.f32 %v570, 0.70710677
        %v573 = verf.f32.pop %v572
        %v574 = vadd.f32 %v573, 1.0
        %v575 = vmul.f32 %v571, %v574
        %v576 = vld [vmem:[%s376] sm:$0xff]
        %v577 = vpack.c.bf16 %v575, %v575
        %v578 = vld [vmem:[%s401] sm:$0xf]
        %v579 = vld [vmem:[%s401 + $0x4] sm:$0xf]
        %v580 = vld [vmem:[%s401 + $0x8] sm:$0xf]
        %v581 = vld [vmem:[%s401 + $0xc] sm:$0xf]
        %v582 = vld [vmem:[%s401 + $0x10] sm:$0xf]
        %v583 = vld [vmem:[%s401 + $0x14] sm:$0xf]
        %v584 = vld [vmem:[%s401 + $0x18] sm:$0xf]
        %v585 = vld [vmem:[%s401 + $0x1c] sm:$0xf]
        %v594 = vunpack.c.l.b16 %v578
        %v595 = vunpack.c.l.b16 %v579
        %v596 = vunpack.c.l.b16 %v580
        %v597 = vunpack.c.l.b16 %v581
        %v598 = vunpack.c.l.b16 %v582
        %v599 = vunpack.c.l.b16 %v583
        %v600 = vunpack.c.l.b16 %v584
        %v601 = vunpack.c.l.b16 %v585
        %v602 = vpack.c.b16 %v595, %v594
        %v603 = vpack.c.b16 %v597, %v596
        %v604 = vpack.c.b16 %v599, %v598
        %v605 = vpack.c.b16 %v601, %v600
        %vm610 = vcmask 523264
        %v612 = vsel %vm610, %v577, 0
        %614 = vmatprep.subr.bf16.mxu0 0
        %615 = vmatpush1.bf16.msra.mxu0 %v602
        %616 = vmatprep.subr.bf16.mxu0 0
        %617 = vmatpush1.bf16.msra.mxu0 %v603
        %618 = vmatprep.subr.bf16.mxu0 0
        %619 = vmatpush1.bf16.msra.mxu0 %v604
        %620 = vmatprep.subr.bf16.mxu0 0
        %621 = vmatpush1.bf16.msra.mxu0 %v605
        %622 = vmatprep.subr.bf16.mxu0 0
        %623 = vmatpush1.bf16.msra.mxu0 0
        %624 = vmatprep.subr.bf16.mxu0 0
        %625 = vmatpush1.bf16.msra.mxu0 0
        %626 = vmatprep.subr.bf16.mxu0 0
        %627 = vmatpush1.bf16.msra.mxu0 0
        %628 = vmatprep.subr.bf16.mxu0 0
        %629 = vmatpush1.bf16.msra.mxu0 0
        %630 = vmatprep.subr.bf16.mxu0 0
        %631 = vmatpush1.bf16.msra.mxu0 0
        %632 = vmatprep.subr.bf16.mxu0 0
        %633 = vmatpush1.bf16.msra.mxu0 0
        %634 = vmatprep.subr.bf16.mxu0 0
        %635 = vmatpush1.bf16.msra.mxu0 0
        %636 = vmatprep.subr.bf16.mxu0 0
        %637 = vmatpush1.bf16.msra.mxu0 0
        %638 = vmatprep.subr.bf16.mxu0 0
        %639 = vmatpush1.bf16.msra.mxu0 0
        %640 = vmatprep.subr.bf16.mxu0 0
        %641 = vmatpush1.bf16.msra.mxu0 0
        %642 = vmatprep.subr.bf16.mxu0 0
        %643 = vmatpush1.bf16.msra.mxu0 0
        %644 = vmatprep.subr.bf16.mxu0 0
        %645 = vmatpush1.bf16.msra.mxu0 0
        %646 = vmatprep.mubr.bf16.mxu0 0
        %647 = vmatmul.mubr.bf16.gmra.mrb[0].mxu0 %v612
        %v648 = vpop.f32.mrb[0].mxu0
        %v649 = vadd.f32 0.0, %v648
        %v650 = vpop.f32.mrb[0].mxu0
        %v651 = vpop.f32.mrb[0].mxu0
        %v652 = vpop.f32.mrb[0].mxu0
        %653 = vdwg.mxu0
        %v654 = vadd.f32 %v576, %v649
        %655 = vst.msk [vmem:[%s376] sm:$0xff] %vm463, %v654
        %s656 = sand.u32 %s240, 1
        %s657 = scalar_lea.sflag [#allocation4], %s656
        %s658 = sand.u32 %s240, 1
        %s659 = smul.addr %s658, 8
        %s660 = scalar_lea.vmem [#allocation3], %s659
        // Predicated region
        $region57: #{tpu_custom_call.1} parent=51 // pred_check
          %p661 = pneg %p250
        $region58: #{tpu_custom_call.1} parent=51 // pred_check_branch
          %663 = sbr.rel (%p661) target = $region60
        $region59: #{tpu_custom_call.1} parent=51 // pred_region
          %s665 = ssub.s32 128, 128
          %666 = vsyncadd %s657, %s665
          %s667 = smul.addr %s26, 128
          %s668 = scalar_lea.hbm %s8, %s667
          %s670 = sshll.u32 %s660, 4
          %s671 = int_to_ptr.vmem [resolvable:$true] %s670
          %673 = dma.vmem_to_hbm [thread:$0]  %s671, 128, %s668, %s657
        $region60: #{tpu_custom_call.1} parent=51 // pred_fallthru
          _
      $region52: #{tpu_custom_call.1} parent=5 // pred_fallthru
        _
      %p674 = scmp.le.s32.totalorder 2, %s17
      // Predicated region
      $region61: #{tpu_custom_call.1} parent=5 // pred_check
        %p675 = pneg %p674
      $region62: #{tpu_custom_call.1} parent=5 // pred_check_branch
        %677 = sbr.rel (%p675) target = $region64
      $region63: #{tpu_custom_call.1} parent=5 // pred_region
        %s678 = ssub.s32 %s17, 2
        // Predicated region
        $region65: #{tpu_custom_call.1} parent=63 // pred_check
          %p679 = pneg %p256
        $region66: #{tpu_custom_call.1} parent=63 // pred_check_branch
          %681 = sbr.rel (%p679) target = $region68
        $region67: #{tpu_custom_call.1} parent=63 // pred_region
          %s682 = sand.u32 %s241, 1
          %s683 = scalar_lea.sflag [#allocation4], %s682
          %s684 = sand.u32 %s241, 1
          %s685 = smul.addr %s684, 8
          %s686 = scalar_lea.vmem [#allocation3], %s685
          %687 = dma.done %s683, 128
        $region68: #{tpu_custom_call.1} parent=63 // pred_fallthru
          _
      $region64: #{tpu_custom_call.1} parent=5 // pred_fallthru
        _
    $region6: #{tpu_custom_call.1} parent=1 // loop_footer
      %s21 = sadd.s32 1, %s17
    $region7: #{tpu_custom_call.1} parent=1 // loop_footer_branch
      %16 = sbr.rel target = $region3
    $region8: #{tpu_custom_call.1} parent=1 // loop_exit
      _
    %688 = vsyncpa [#allocation4], 1
    %s689 = scalar_lea.sflag [#allocation4], 1
    %690 = vsyncpa %s689, 1

</llo_original>
